<compile_context>
chip_gen: v6e
topology: v6e:2x2x1
jax: 0.10.0
libtpu: 0.0.40
codegen_flags: <defaults>
</compile_context>

<pallas_src>
import functools

import jax
import jax.numpy as jnp
from jax.experimental import pallas as pl
from jax.experimental.pallas import tpu as pltpu


def _round_up(x, m):
    return (x + m - 1) // m * m


def bow_kernel(seq_ref, mask_ref, blob_ref, out_ref):
    """Whole BOWModel forward (full padded batch) in one program.

    seq_ref  : (2*Bp*L, W)       premises then hypotheses, flattened (batch, seq)
    mask_ref : (2*Bp*L, 1)       sequence mask, one value per sequence row
    blob_ref : (8 + Wp + 4N, N)  packed params, N = round_up(2H, 128):
                 rows 0..3          : b_rot | b1 | b2 | b_mu|b_lv  (zero padded)
                 rows [8, 8+W)      : w_rot       (cols [0, H) real)
                 rows [8+Wp, +N)    : w1 prem half (rows [0,H), cols [0,2H))
                 next N rows        : w1 hypo half
                 next N rows        : w2           (rows/cols [0, 2H))
                 next N rows        : w_mu | w_lv  (rows [0,2H), cols [0,2H))
    out_ref  : (Bp, N)           lanes [0, H) = mu, [H, 2H) = log_sigma
    """
    rows, W = seq_ref.shape
    N = blob_ref.shape[1]
    cd = blob_ref.dtype

    Wp = _round_up(W, 8)
    o_wrot = 8
    o_w1p = 8 + Wp
    o_w1h = o_w1p + N
    o_w2 = o_w1h + N
    o_wh = o_w2 + N

    b_rot = blob_ref[0:1, :]
    b1 = blob_ref[1:2, :]
    b2 = blob_ref[2:3, :]
    b_head = blob_ref[3:4, :]

    # ---- rotation Linear + ReLU on the whole [prem ; hypo] slab (one MXU pass) ----
    z = jnp.dot(seq_ref[...], blob_ref[o_wrot:o_wrot + W, :],
                preferred_element_type=jnp.float32) + b_rot
    z = jnp.maximum(z, 0.0)                       # (rows, N), f32
    # apply the sequence mask per row (VPU lane-broadcast multiply)
    z = z * mask_ref[...]

    # ---- sum-pool over sequence positions as an MXU matmul with an
    #      in-kernel iota-built block-diagonal 0/1 selector (no HBM operand) ----
    Bp = out_ref.shape[0]
    two_bp = 2 * Bp
    L = rows // two_bp
    row_ids = jax.lax.broadcasted_iota(jnp.int32, (two_bp, rows), 0)
    col_ids = jax.lax.broadcasted_iota(jnp.int32, (two_bp, rows), 1)
    lo = row_ids * L
    sel = ((col_ids >= lo) & (col_ids < lo + L)).astype(jnp.float32)  # (2Bp, rows)
    enc = jnp.dot(sel.astype(cd), z.astype(cd),
                  preferred_element_type=jnp.float32)                 # (2Bp, N)

    prem_enc = enc[:Bp]                           # sublane-aligned split (Bp % 8 == 0)
    hypo_enc = enc[Bp:]

    # ---- layer 1: split-weight form of concat([prem, hypo], -1) @ w1 ----
    h = (jnp.dot(prem_enc.astype(cd), blob_ref[o_w1p:o_w1p + N, :],
                 preferred_element_type=jnp.float32)
         + jnp.dot(hypo_enc.astype(cd), blob_ref[o_w1h:o_w1h + N, :],
                   preferred_element_type=jnp.float32)
         + b1)
    h = jnp.maximum(h, 0.0)

    # ---- layer 2 ----
    h = jnp.maximum(
        jnp.dot(h.astype(cd), blob_ref[o_w2:o_w2 + N, :],
                preferred_element_type=jnp.float32) + b2, 0.0)

    # ---- fused mu / logvar heads -> one lane-dense (Bp, N) tile ----
    out = jnp.dot(h.astype(cd), blob_ref[o_wh:o_wh + N, :],
                  preferred_element_type=jnp.float32) + b_head
    out_ref[...] = out.astype(out_ref.dtype)


def pack_params(params, compute_dtype=jnp.float32):
    """Pack & pad all weights/biases ONCE (init time) into a single blob.

    On v6e/v7x pass compute_dtype=jnp.bfloat16 (and relax the correctness
    tolerance); matmul accumulation stays f32 inside the kernel.
    """
    W, H = params['w_rot'].shape
    N = _round_up(2 * H, 128)
    Wp = _round_up(W, 8)

    def pad2(x, r, c):
        return jnp.pad(x, ((0, r - x.shape[0]), (0, c - x.shape[1])))

    biases = jnp.zeros((8, N), jnp.float32)
    biases = biases.at[0, :H].set(params['b_rot'][0])
    biases = biases.at[1, :2 * H].set(params['b1'][0])
    biases = biases.at[2, :2 * H].set(params['b2'][0])
    biases = biases.at[3, :H].set(params['b_mu'][0])
    biases = biases.at[3, H:2 * H].set(params['b_lv'][0])

    w_rot = pad2(params['w_rot'], Wp, N)
    w1p = pad2(params['w1'][:H], N, N)
    w1h = pad2(params['w1'][H:], N, N)
    w2 = pad2(params['w2'], N, N)
    w_head = pad2(jnp.concatenate([params['w_mu'], params['w_lv']], axis=1), N, N)

    blob = jnp.concatenate([biases, w_rot, w1p, w1h, w2, w_head], axis=0)
    return blob.astype(compute_dtype)


def bow_forward(prem_emb, prem_mask, hypo_emb, hypo_mask, blob, *, hidden_size):
    B, Lp, W = prem_emb.shape
    _, Lh, _ = hypo_emb.shape
    L = max(Lp, Lh)
    Bp = _round_up(B, 8)          # sublane-aligned batch + lane-dense out tile
    H = hidden_size
    N = blob.shape[1]

    # --- unavoidable per-call data prep: pad seq/batch, stack prem|hypo ---
    def prep(emb, mask):
        emb = jnp.pad(emb, ((0, Bp - B), (0, L - emb.shape[1]), (0, 0)))
        mask = jnp.pad(mask, ((0, Bp - B), (0, L - mask.shape[1])))
        return emb, mask

    pe, pm = prep(prem_emb, prem_mask)
    he, hm = prep(hypo_emb, hypo_mask)
    seq = jnp.concatenate([pe, he], axis=0).reshape(2 * Bp * L, W).astype(blob.dtype)
    mask_rows = (jnp.concatenate([pm, hm], axis=0)
                 .reshape(2 * Bp * L, 1).astype(jnp.float32))

    rows = 2 * Bp * L
    flops = (2 * rows * W * N              # rotation
             + 2 * (2 * Bp) * rows * N     # pooling-as-matmul
             + 2 * 2 * Bp * N * N          # layer 1 (two half-matmuls)
             + 2 * Bp * N * N              # layer 2
             + 2 * Bp * N * N)             # fused heads
    bytes_accessed = (seq.size * seq.dtype.itemsize
                      + mask_rows.size * 4
                      + blob.size * blob.dtype.itemsize
                      + Bp * N * 4)
    cost = pl.CostEstimate(flops=flops, transcendentals=0,
                           bytes_accessed=bytes_accessed)

    vmem = pl.BlockSpec(memory_space=pltpu.MemorySpace.VMEM)
    out = pl.pallas_call(
        bow_kernel,
        out_shape=jax.ShapeDtypeStruct((Bp, N), jnp.float32),
        in_specs=[vmem, vmem, vmem],
        out_specs=vmem,
        cost_estimate=cost,
    )(seq, mask_rows, blob)

    mu = out[:B, :H]
    log_sigma = out[:B, H:2 * H]
    return mu, log_sigma, None


def make_params(key, word_vec_size, hidden_size):
    """Deterministic synthetic parameters. Weights are [in, out]."""
    ks = jax.random.split(key, 10)
    W, H = word_vec_size, hidden_size

    def lin(kw, kb, fan_in, fan_out):
        scale = 1.0 / jnp.sqrt(fan_in)
        w = jax.random.uniform(kw, (fan_in, fan_out), jnp.float32, -scale, scale)
        b = jax.random.uniform(kb, (1, fan_out), jnp.float32, -scale, scale)
        return w, b

    p = {}
    p['w_rot'], p['b_rot'] = lin(ks[0], ks[1], W, H)
    p['w1'],    p['b1']    = lin(ks[2], ks[3], 2 * H, 2 * H)
    p['w2'],    p['b2']    = lin(ks[4], ks[5], 2 * H, 2 * H)
    p['w_mu'],  p['b_mu']  = lin(ks[6], ks[7], 2 * H, H)
    p['w_lv'],  p['b_lv']  = lin(ks[8], ks[9], 2 * H, H)
    return p


def bow_reference(prem_emb, prem_mask, hypo_emb, hypo_mask, p):
    """Plain-JAX reference mirroring the PyTorch module (inference mode)."""
    def encode(seq, mask):
        z = jnp.maximum(jnp.einsum('blw,wh->blh', seq, p['w_rot']) + p['b_rot'], 0.0)
        return jnp.sum(z * mask[..., None], axis=1)
    x = jnp.concatenate([encode(prem_emb, prem_mask),
                         encode(hypo_emb, hypo_mask)], axis=-1)
    h = jnp.maximum(x @ p['w1'] + p['b1'], 0.0)
    h = jnp.maximum(h @ p['w2'] + p['b2'], 0.0)
    return h @ p['w_mu'] + p['b_mu'], h @ p['w_lv'] + p['b_lv']


if __name__ == "__main__":
    B, Lp, Lh = 2, 8, 8
    word_vec_size, hidden_size = 32, 32

    key = jax.random.PRNGKey(0)
    k_prem, k_hypo, k_pm, k_hm, k_params = jax.random.split(key, 5)

    prem_emb = jax.random.normal(k_prem, (B, Lp, word_vec_size), jnp.float32)
    hypo_emb = jax.random.normal(k_hypo, (B, Lh, word_vec_size), jnp.float32)
    # binary masks (some padding positions zeroed out)
    prem_mask = (jax.random.uniform(k_pm, (B, Lp)) > 0.25).astype(jnp.float32)
    hypo_mask = (jax.random.uniform(k_hm, (B, Lh)) > 0.25).astype(jnp.float32)

    params = make_params(k_params, word_vec_size, hidden_size)

    # Pack/pad parameters ONCE (init time).  On v6e/v7x use
    # compute_dtype=jnp.bfloat16 here and relax the tolerance below.
    blob = pack_params(params, compute_dtype=jnp.float32)

    fwd = jax.jit(functools.partial(bow_forward, hidden_size=hidden_size))
    mu, log_sigma, _ = fwd(prem_emb, prem_mask, hypo_emb, hypo_mask, blob)
    jax.block_until_ready((mu, log_sigma))

    mu_ref, lv_ref = bow_reference(prem_emb, prem_mask, hypo_emb, hypo_mask, params)
    assert mu.shape == (B, hidden_size) and log_sigma.shape == (B, hidden_size)
    assert jnp.allclose(mu, mu_ref, atol=1e-4), "mu mismatch"
    assert jnp.allclose(log_sigma, lv_ref, atol=1e-4), "log_sigma mismatch"

    print("KERNEL_OK")
</pallas_src>

<mosaic_0001>
module attributes {stable_mosaic.version = 11 : i64} {
  func.func @bow_kernel(%arg0: memref<128x32xf32, #tpu.memory_space<vmem>>, %arg1: memref<128x1xf32, #tpu.memory_space<vmem>>, %arg2: memref<552x128xf32, #tpu.memory_space<vmem>>, %arg3: memref<8x128xf32, #tpu.memory_space<vmem>>) attributes {dimension_semantics = [], scalar_prefetch = 0 : i64, scratch_operands = 0 : i64, tpu.core_type = #tpu.core_type<tc>} {
    %c0 = arith.constant 0 : index
    %c0_0 = arith.constant 0 : index
    %0 = vector.load %arg2[%c0, %c0_0] : memref<552x128xf32, #tpu.memory_space<vmem>>, vector<1x128xf32>
    %c1 = arith.constant 1 : index
    %c0_1 = arith.constant 0 : index
    %1 = vector.load %arg2[%c1, %c0_1] : memref<552x128xf32, #tpu.memory_space<vmem>>, vector<1x128xf32>
    %c2 = arith.constant 2 : index
    %c0_2 = arith.constant 0 : index
    %2 = vector.load %arg2[%c2, %c0_2] : memref<552x128xf32, #tpu.memory_space<vmem>>, vector<1x128xf32>
    %c3 = arith.constant 3 : index
    %c0_3 = arith.constant 0 : index
    %3 = vector.load %arg2[%c3, %c0_3] : memref<552x128xf32, #tpu.memory_space<vmem>>, vector<1x128xf32>
    %c0_4 = arith.constant 0 : index
    %c0_5 = arith.constant 0 : index
    %4 = vector.load %arg0[%c0_4, %c0_5] : memref<128x32xf32, #tpu.memory_space<vmem>>, vector<128x32xf32>
    %c8 = arith.constant 8 : index
    %c0_6 = arith.constant 0 : index
    %5 = vector.load %arg2[%c8, %c0_6] : memref<552x128xf32, #tpu.memory_space<vmem>>, vector<32x128xf32>
    %cst = arith.constant dense<0.000000e+00> : vector<128x128xf32>
    %6 = tpu.matmul %4, %5, %cst {dimension_numbers = #tpu.dot_dimension_numbers<[1], [0], [0], [1], [0, 0, 1, 1], [], []>} : vector<128x32xf32>, vector<32x128xf32>, vector<128x128xf32> -> vector<128x128xf32>
    %7 = vector.broadcast %0 : vector<1x128xf32> to vector<128x128xf32>
    %8 = arith.addf %6, %7 : vector<128x128xf32>
    %cst_7 = arith.constant 0.000000e+00 : f32
    %9 = vector.broadcast %cst_7 : f32 to vector<128x128xf32>
    %10 = arith.maximumf %8, %9 : vector<128x128xf32>
    %c0_8 = arith.constant 0 : index
    %c0_9 = arith.constant 0 : index
    %11 = vector.load %arg1[%c0_8, %c0_9] : memref<128x1xf32, #tpu.memory_space<vmem>>, vector<128x1xf32>
    %12 = vector.broadcast %11 : vector<128x1xf32> to vector<128x128xf32>
    %13 = arith.mulf %10, %12 : vector<128x128xf32>
    %14 = tpu.iota {dimensions = array<i32: 0>} : vector<16x128xi32>
    %15 = tpu.iota {dimensions = array<i32: 1>} : vector<16x128xi32>
    %c8_i32 = arith.constant 8 : i32
    %16 = vector.broadcast %c8_i32 : i32 to vector<16x128xi32>
    %17 = arith.muli %14, %16 : vector<16x128xi32>
    %18 = arith.cmpi sge, %15, %17 : vector<16x128xi32>
    %c8_i32_10 = arith.constant 8 : i32
    %19 = vector.broadcast %c8_i32_10 : i32 to vector<16x128xi32>
    %20 = arith.addi %17, %19 : vector<16x128xi32>
    %21 = arith.cmpi slt, %15, %20 : vector<16x128xi32>
    %22 = arith.andi %18, %21 : vector<16x128xi1>
    %23 = arith.extui %22 : vector<16x128xi1> to vector<16x128xi32>
    %24 = arith.sitofp %23 : vector<16x128xi32> to vector<16x128xf32>
    %cst_11 = arith.constant dense<0.000000e+00> : vector<16x128xf32>
    %25 = tpu.matmul %24, %13, %cst_11 {dimension_numbers = #tpu.dot_dimension_numbers<[1], [0], [0], [1], [0, 0, 1, 1], [], []>} : vector<16x128xf32>, vector<128x128xf32>, vector<16x128xf32> -> vector<16x128xf32>
    %26 = vector.extract_strided_slice %25 {offsets = [0, 0], sizes = [8, 128], strides = [1, 1]} : vector<16x128xf32> to vector<8x128xf32>
    %27 = vector.extract_strided_slice %25 {offsets = [8, 0], sizes = [8, 128], strides = [1, 1]} : vector<16x128xf32> to vector<8x128xf32>
    %c40 = arith.constant 40 : index
    %c0_12 = arith.constant 0 : index
    %28 = vector.load %arg2[%c40, %c0_12] : memref<552x128xf32, #tpu.memory_space<vmem>>, vector<128x128xf32>
    %cst_13 = arith.constant dense<0.000000e+00> : vector<8x128xf32>
    %29 = tpu.matmul %26, %28, %cst_13 {dimension_numbers = #tpu.dot_dimension_numbers<[1], [0], [0], [1], [0, 0, 1, 1], [], []>} : vector<8x128xf32>, vector<128x128xf32>, vector<8x128xf32> -> vector<8x128xf32>
    %c168 = arith.constant 168 : index
    %c0_14 = arith.constant 0 : index
    %30 = vector.load %arg2[%c168, %c0_14] : memref<552x128xf32, #tpu.memory_space<vmem>>, vector<128x128xf32>
    %cst_15 = arith.constant dense<0.000000e+00> : vector<8x128xf32>
    %31 = tpu.matmul %27, %30, %cst_15 {dimension_numbers = #tpu.dot_dimension_numbers<[1], [0], [0], [1], [0, 0, 1, 1], [], []>} : vector<8x128xf32>, vector<128x128xf32>, vector<8x128xf32> -> vector<8x128xf32>
    %32 = arith.addf %29, %31 : vector<8x128xf32>
    %33 = vector.broadcast %1 : vector<1x128xf32> to vector<8x128xf32>
    %34 = arith.addf %32, %33 : vector<8x128xf32>
    %cst_16 = arith.constant 0.000000e+00 : f32
    %35 = vector.broadcast %cst_16 : f32 to vector<8x128xf32>
    %36 = arith.maximumf %34, %35 : vector<8x128xf32>
    %c296 = arith.constant 296 : index
    %c0_17 = arith.constant 0 : index
    %37 = vector.load %arg2[%c296, %c0_17] : memref<552x128xf32, #tpu.memory_space<vmem>>, vector<128x128xf32>
    %cst_18 = arith.constant dense<0.000000e+00> : vector<8x128xf32>
    %38 = tpu.matmul %36, %37, %cst_18 {dimension_numbers = #tpu.dot_dimension_numbers<[1], [0], [0], [1], [0, 0, 1, 1], [], []>} : vector<8x128xf32>, vector<128x128xf32>, vector<8x128xf32> -> vector<8x128xf32>
    %39 = vector.broadcast %2 : vector<1x128xf32> to vector<8x128xf32>
    %40 = arith.addf %38, %39 : vector<8x128xf32>
    %cst_19 = arith.constant 0.000000e+00 : f32
    %41 = vector.broadcast %cst_19 : f32 to vector<8x128xf32>
    %42 = arith.maximumf %40, %41 : vector<8x128xf32>
    %c424 = arith.constant 424 : index
    %c0_20 = arith.constant 0 : index
    %43 = vector.load %arg2[%c424, %c0_20] : memref<552x128xf32, #tpu.memory_space<vmem>>, vector<128x128xf32>
    %cst_21 = arith.constant dense<0.000000e+00> : vector<8x128xf32>
    %44 = tpu.matmul %42, %43, %cst_21 {dimension_numbers = #tpu.dot_dimension_numbers<[1], [0], [0], [1], [0, 0, 1, 1], [], []>} : vector<8x128xf32>, vector<128x128xf32>, vector<8x128xf32> -> vector<8x128xf32>
    %45 = vector.broadcast %3 : vector<1x128xf32> to vector<8x128xf32>
    %46 = arith.addf %44, %45 : vector<8x128xf32>
    %c0_22 = arith.constant 0 : index
    %c0_23 = arith.constant 0 : index
    %47 = vector.load %arg3[%c0_22, %c0_23] : memref<8x128xf32, #tpu.memory_space<vmem>>, vector<8x128xf32>
    tpu.vector_store %arg3[%c0_22, %c0_23], %46 {strides = array<i32>} : memref<8x128xf32, #tpu.memory_space<vmem>>, vector<8x128xf32>,
    return
  }
}

</mosaic_0001>

<llo_original>
// kernel: bow_forward.1
$region0: #{bow_forward.1}
  #allocation0 [shape = 'u32[]', space=smem, size = 0x4, offset = 0x4, fixed_abs, tag = 'smem constant byte address 0x4 - core index']
  #allocation1 [shape = 'u32[144,128]{1,0:T(1,128)}', space=vmem, size = 0x12000, scoped, tag = 'internal scratch']
  %s0 = inlined_call_operand.vmem [shape: f32[128,32], index: 0, kind: input, shape index: {}]
  %s1 = inlined_call_operand.vmem [shape: f32[128,1], index: 1, kind: input, shape index: {}]
  %s2 = inlined_call_operand.hbm [shape: f32[552,128], index: 2, kind: input, shape index: {}]
  %s3 = inlined_call_operand.vmem [shape: f32[8,128], index: 3, kind: output, shape index: {}]
  %s4 = sld [smem:[#allocation0]]
  $region26: #{bow_forward.1} parent=0
    _
  %s6 = ssub.s32 1, %s4
  %s7 = scalar_select 0, %s6, %s4
  $region1: #{bow_forward.1} parent=0
    #allocation2 [shape = 'u8[282624]{0}', space=vmem, size = 0x45000, scoped, tag = 'input window, operand 2, single buffered']
    #allocation3 [shape = 's32[1]{0}', space=sflag, size = 0x4, scoped, tag = 'scoped memory for bow_forward.1']
    %8 = vsyncpa [#allocation3], 0
    // Predicated region
    $region2: #{bow_forward.1} parent=1 // pred_check
      _
    $region3: #{bow_forward.1} parent=1 // pred_check_branch
      %10 = sbr.rel (0) target = $region5
    $region4: #{bow_forward.1} parent=1 // pred_region
      _
    $region5: #{bow_forward.1} parent=1 // pred_fallthru
      _
    // Predicated region
    $region6: #{bow_forward.1} parent=1 // pred_check
      _
    $region7: #{bow_forward.1} parent=1 // pred_check_branch
      %12 = sbr.rel (0) target = $region9
    $region8: #{bow_forward.1} parent=1 // pred_region
      _
    $region9: #{bow_forward.1} parent=1 // pred_fallthru
      _
    // Predicated region
    $region10: #{bow_forward.1} parent=1 // pred_check
      _
    $region11: #{bow_forward.1} parent=1 // pred_check_branch
      %14 = sbr.rel (0) target = $region13
    $region12: #{bow_forward.1} parent=1 // pred_region
      %s16 = ssub.s32 8832, 8832
      %17 = vsyncadd [#allocation3], %s16
      %s18 = sshll.u32 [#allocation2], 4
      %s19 = int_to_ptr.vmem [resolvable:$true] %s18
      %24 = dma.hbm_to_vmem [thread:$0]  %s2, 8832, %s19, [#allocation3], 128, 128, 8
    $region13: #{bow_forward.1} parent=1 // pred_fallthru
      _
    // Predicated region
    $region14: #{bow_forward.1} parent=1 // pred_check
      _
    $region15: #{bow_forward.1} parent=1 // pred_check_branch
      %26 = sbr.rel (0) target = $region17
    $region16: #{bow_forward.1} parent=1 // pred_region
      %27 = dma.done [#allocation3], 8832
    $region17: #{bow_forward.1} parent=1 // pred_fallthru
      _
    %v28 = vld [vmem:[#allocation2] sm:$0x1]
    %v29 = vld [vmem:[#allocation2 + $0x1] sm:$0x1]
    %v30 = vld [vmem:[#allocation2 + $0x2] sm:$0x1]
    %v31 = vld [vmem:[#allocation2 + $0x3] sm:$0x1]
    %v32 = vld [vmem:[%s0] sm:$0xff]
    %v33 = vld [vmem:[%s0 + $0x8] sm:$0xff]
    %v34 = vld [vmem:[%s0 + $0x10] sm:$0xff]
    %v35 = vld [vmem:[%s0 + $0x18] sm:$0xff]
    %v36 = vld [vmem:[%s0 + $0x20] sm:$0xff]
    %v37 = vld [vmem:[%s0 + $0x28] sm:$0xff]
    %v38 = vld [vmem:[%s0 + $0x30] sm:$0xff]
    %v39 = vld [vmem:[%s0 + $0x38] sm:$0xff]
    %v40 = vld [vmem:[%s0 + $0x40] sm:$0xff]
    %v41 = vld [vmem:[%s0 + $0x48] sm:$0xff]
    %v42 = vld [vmem:[%s0 + $0x50] sm:$0xff]
    %v43 = vld [vmem:[%s0 + $0x58] sm:$0xff]
    %v44 = vld [vmem:[%s0 + $0x60] sm:$0xff]
    %v45 = vld [vmem:[%s0 + $0x68] sm:$0xff]
    %v46 = vld [vmem:[%s0 + $0x70] sm:$0xff]
    %v47 = vld [vmem:[%s0 + $0x78] sm:$0xff]
    %v48 = vld [vmem:[#allocation2 + $0x8] sm:$0xff]
    %v49 = vld [vmem:[#allocation2 + $0x10] sm:$0xff]
    %v50 = vld [vmem:[#allocation2 + $0x18] sm:$0xff]
    %v51 = vld [vmem:[#allocation2 + $0x20] sm:$0xff]
    %v52 = vlaneseq
    %v53 = vshrl.u32 %v52, 7
    %v54 = vsub.s32 0, %v53
    %v55 = vrot.slane %v28, %v54
    %vm56 = vcmask 261120
    %v58 = vsel %vm56, %v32, 0
    %v61 = vsel %vm56, %v33, 0
    %v64 = vsel %vm56, %v34, 0
    %v67 = vsel %vm56, %v35, 0
    %v70 = vsel %vm56, %v36, 0
    %v73 = vsel %vm56, %v37, 0
    %v76 = vsel %vm56, %v38, 0
    %v79 = vsel %vm56, %v39, 0
    %v82 = vsel %vm56, %v40, 0
    %v85 = vsel %vm56, %v41, 0
    %v88 = vsel %vm56, %v42, 0
    %v91 = vsel %vm56, %v43, 0
    %v94 = vsel %vm56, %v44, 0
    %v97 = vsel %vm56, %v45, 0
    %v100 = vsel %vm56, %v46, 0
    %v103 = vsel %vm56, %v47, 0
    %105 = vmatprep.subr.mxu0 0.0
    %106 = vmatpush1.msra.mxu0 0.0
    %107 = vmatprep.subr.mxu0 0.0
    %108 = vmatpush1.msra.mxu0 0.0
    %109 = vmatprep.subr.mxu0 0.0
    %110 = vmatpush1.msra.mxu0 0.0
    %111 = vmatprep.subr.mxu0 0.0
    %112 = vmatpush1.msra.mxu0 0.0
    %113 = vmatprep.subr.mxu0 0.0
    %114 = vmatpush1.msra.mxu0 0.0
    %115 = vmatprep.subr.mxu0 0.0
    %116 = vmatpush1.msra.mxu0 0.0
    %117 = vmatprep.subr.mxu0 0.0
    %118 = vmatpush1.msra.mxu0 0.0
    %119 = vmatprep.subr.mxu0 0.0
    %120 = vmatpush1.msra.mxu0 0.0
    %121 = vmatprep.subr.mxu0 0.0
    %122 = vmatpush1.msra.mxu0 0.0
    %123 = vmatprep.subr.mxu0 0.0
    %124 = vmatpush1.msra.mxu0 0.0
    %125 = vmatprep.subr.mxu0 0.0
    %126 = vmatpush1.msra.mxu0 0.0
    %127 = vmatprep.subr.mxu0 0.0
    %128 = vmatpush1.msra.mxu0 0.0
    %129 = vmatprep.subr.mxu0 0.0
    %130 = vmatpush1.msra.mxu0 %v51
    %131 = vmatprep.subr.mxu0 0.0
    %132 = vmatpush1.msra.mxu0 %v50
    %133 = vmatprep.subr.mxu0 0.0
    %134 = vmatpush1.msra.mxu0 %v49
    %135 = vmatprep.subr.mxu0 0.0
    %136 = vmatpush1.msra.mxu0 %v48
    %137 = vmatprep.subr.mxu0 0.0
    %138 = vmatpush2.msra.mxu0 0.0
    %139 = vmatprep.subr.mxu0 0.0
    %140 = vmatpush2.msra.mxu0 0.0
    %141 = vmatprep.subr.mxu0 0.0
    %142 = vmatpush2.msra.mxu0 0.0
    %143 = vmatprep.subr.mxu0 0.0
    %144 = vmatpush2.msra.mxu0 0.0
    %145 = vmatprep.subr.mxu0 0.0
    %146 = vmatpush2.msra.mxu0 0.0
    %147 = vmatprep.subr.mxu0 0.0
    %148 = vmatpush2.msra.mxu0 0.0
    %149 = vmatprep.subr.mxu0 0.0
    %150 = vmatpush2.msra.mxu0 0.0
    %151 = vmatprep.subr.mxu0 0.0
    %152 = vmatpush2.msra.mxu0 0.0
    %153 = vmatprep.subr.mxu0 0.0
    %154 = vmatpush2.msra.mxu0 0.0
    %155 = vmatprep.subr.mxu0 0.0
    %156 = vmatpush2.msra.mxu0 0.0
    %157 = vmatprep.subr.mxu0 0.0
    %158 = vmatpush2.msra.mxu0 0.0
    %159 = vmatprep.subr.mxu0 0.0
    %160 = vmatpush2.msra.mxu0 0.0
    %161 = vmatprep.subr.mxu0 0.0
    %162 = vmatpush2.msra.mxu0 0.0
    %163 = vmatprep.subr.mxu0 0.0
    %164 = vmatpush2.msra.mxu0 0.0
    %165 = vmatprep.subr.mxu0 0.0
    %166 = vmatpush2.msra.mxu0 0.0
    %167 = vmatprep.subr.mxu0 0.0
    %168 = vmatpush2.msra.mxu0 0.0
    %169 = vmatprep.mubr.f32.mxu0 0.0
    %170 = vmatmul.mubr.f32.gmra.mxu0 %v58
    %v171 = vpop.f32.mrf.mxu0
    %v172 = vadd.f32 %v55, %v171
    %v173 = vpop.f32.mrf.mxu0
    %174 = vmatprep.mubr.f32.mxu0 0.0
    %175 = vmatmul.mubr.f32.gmra.mxu0 %v61
    %v176 = vpop.f32.mrf.mxu0
    %v177 = vadd.f32 %v55, %v176
    %v178 = vpop.f32.mrf.mxu0
    %179 = vmatprep.mubr.f32.mxu0 0.0
    %180 = vmatmul.mubr.f32.gmra.mxu0 %v64
    %v181 = vpop.f32.mrf.mxu0
    %v182 = vadd.f32 %v55, %v181
    %v183 = vpop.f32.mrf.mxu0
    %184 = vmatprep.mubr.f32.mxu0 0.0
    %185 = vmatmul.mubr.f32.gmra.mxu0 %v67
    %v186 = vpop.f32.mrf.mxu0
    %v187 = vadd.f32 %v55, %v186
    %v188 = vpop.f32.mrf.mxu0
    %189 = vmatprep.mubr.f32.mxu0 0.0
    %190 = vmatmul.mubr.f32.gmra.mxu0 %v70
    %v191 = vpop.f32.mrf.mxu0
    %v192 = vadd.f32 %v55, %v191
    %v193 = vpop.f32.mrf.mxu0
    %194 = vmatprep.mubr.f32.mxu0 0.0
    %195 = vmatmul.mubr.f32.gmra.mxu0 %v73
    %v196 = vpop.f32.mrf.mxu0
    %v197 = vadd.f32 %v55, %v196
    %v198 = vpop.f32.mrf.mxu0
    %199 = vmatprep.mubr.f32.mxu0 0.0
    %200 = vmatmul.mubr.f32.gmra.mxu0 %v76
    %v201 = vpop.f32.mrf.mxu0
    %v202 = vadd.f32 %v55, %v201
    %v203 = vpop.f32.mrf.mxu0
    %204 = vmatprep.mubr.f32.mxu0 0.0
    %205 = vmatmul.mubr.f32.gmra.mxu0 %v79
    %v206 = vpop.f32.mrf.mxu0
    %v207 = vadd.f32 %v55, %v206
    %v208 = vpop.f32.mrf.mxu0
    %209 = vmatprep.mubr.f32.mxu0 0.0
    %210 = vmatmul.mubr.f32.gmra.mxu0 %v82
    %v211 = vpop.f32.mrf.mxu0
    %v212 = vadd.f32 %v55, %v211
    %v213 = vpop.f32.mrf.mxu0
    %214 = vmatprep.mubr.f32.mxu0 0.0
    %215 = vmatmul.mubr.f32.gmra.mxu0 %v85
    %v216 = vpop.f32.mrf.mxu0
    %v217 = vadd.f32 %v55, %v216
    %v218 = vpop.f32.mrf.mxu0
    %219 = vmatprep.mubr.f32.mxu0 0.0
    %220 = vmatmul.mubr.f32.gmra.mxu0 %v88
    %v221 = vpop.f32.mrf.mxu0
    %v222 = vadd.f32 %v55, %v221
    %v223 = vpop.f32.mrf.mxu0
    %224 = vmatprep.mubr.f32.mxu0 0.0
    %225 = vmatmul.mubr.f32.gmra.mxu0 %v91
    %v226 = vpop.f32.mrf.mxu0
    %v227 = vadd.f32 %v55, %v226
    %v228 = vpop.f32.mrf.mxu0
    %229 = vmatprep.mubr.f32.mxu0 0.0
    %230 = vmatmul.mubr.f32.gmra.mxu0 %v94
    %v231 = vpop.f32.mrf.mxu0
    %v232 = vadd.f32 %v55, %v231
    %v233 = vpop.f32.mrf.mxu0
    %234 = vmatprep.mubr.f32.mxu0 0.0
    %235 = vmatmul.mubr.f32.gmra.mxu0 %v97
    %v236 = vpop.f32.mrf.mxu0
    %v237 = vadd.f32 %v55, %v236
    %v238 = vpop.f32.mrf.mxu0
    %239 = vmatprep.mubr.f32.mxu0 0.0
    %240 = vmatmul.mubr.f32.gmra.mxu0 %v100
    %v241 = vpop.f32.mrf.mxu0
    %v242 = vadd.f32 %v55, %v241
    %v243 = vpop.f32.mrf.mxu0
    %244 = vmatprep.mubr.f32.mxu0 0.0
    %245 = vmatmul.mubr.f32.gmra.mxu0 %v103
    %v246 = vpop.f32.mrf.mxu0
    %v247 = vadd.f32 %v55, %v246
    %v248 = vpop.f32.mrf.mxu0
    %249 = vdwg.mxu0
    %v250 = vmax.f32 %v172, 0.0
    %v251 = vmax.f32 %v177, 0.0
    %v252 = vmax.f32 %v182, 0.0
    %v253 = vmax.f32 %v187, 0.0
    %v254 = vmax.f32 %v192, 0.0
    %v255 = vmax.f32 %v197, 0.0
    %v256 = vmax.f32 %v202, 0.0
    %v257 = vmax.f32 %v207, 0.0
    %v258 = vmax.f32 %v212, 0.0
    %v259 = vmax.f32 %v217, 0.0
    %v260 = vmax.f32 %v222, 0.0
    %v261 = vmax.f32 %v227, 0.0
    %v262 = vmax.f32 %v232, 0.0
    %v263 = vmax.f32 %v237, 0.0
    %v264 = vmax.f32 %v242, 0.0
    %v265 = vmax.f32 %v247, 0.0
    %v266 = vld [vmem:[%s1] sm:$0xff]
    %v267 = vld [vmem:[%s1 + $0x8] sm:$0xff]
    %v268 = vld [vmem:[%s1 + $0x10] sm:$0xff]
    %v269 = vld [vmem:[%s1 + $0x18] sm:$0xff]
    %v270 = vld [vmem:[%s1 + $0x20] sm:$0xff]
    %v271 = vld [vmem:[%s1 + $0x28] sm:$0xff]
    %v272 = vld [vmem:[%s1 + $0x30] sm:$0xff]
    %v273 = vld [vmem:[%s1 + $0x38] sm:$0xff]
    %v274 = vld [vmem:[%s1 + $0x40] sm:$0xff]
    %v275 = vld [vmem:[%s1 + $0x48] sm:$0xff]
    %v276 = vld [vmem:[%s1 + $0x50] sm:$0xff]
    %v277 = vld [vmem:[%s1 + $0x58] sm:$0xff]
    %v278 = vld [vmem:[%s1 + $0x60] sm:$0xff]
    %v279 = vld [vmem:[%s1 + $0x68] sm:$0xff]
    %v280 = vld [vmem:[%s1 + $0x70] sm:$0xff]
    %v281 = vld [vmem:[%s1 + $0x78] sm:$0xff]
    %283 = vset.pattern.permute.xlu0 0
    %284 = vperm.xlu0 %283, %v266
    %v285 = vpop.permute.xlu0 %284
    %288 = vset.pattern.permute.xlu0 0
    %289 = vperm.xlu0 %288, %v267
    %v290 = vpop.permute.xlu0 %289
    %293 = vset.pattern.permute.xlu0 0
    %294 = vperm.xlu0 %293, %v268
    %v295 = vpop.permute.xlu0 %294
    %298 = vset.pattern.permute.xlu0 0
    %299 = vperm.xlu0 %298, %v269
    %v300 = vpop.permute.xlu0 %299
    %303 = vset.pattern.permute.xlu0 0
    %304 = vperm.xlu0 %303, %v270
    %v305 = vpop.permute.xlu0 %304
    %308 = vset.pattern.permute.xlu0 0
    %309 = vperm.xlu0 %308, %v271
    %v310 = vpop.permute.xlu0 %309
    %313 = vset.pattern.permute.xlu0 0
    %314 = vperm.xlu0 %313, %v272
    %v315 = vpop.permute.xlu0 %314
    %318 = vset.pattern.permute.xlu0 0
    %319 = vperm.xlu0 %318, %v273
    %v320 = vpop.permute.xlu0 %319
    %323 = vset.pattern.permute.xlu0 0
    %324 = vperm.xlu0 %323, %v274
    %v325 = vpop.permute.xlu0 %324
    %328 = vset.pattern.permute.xlu0 0
    %329 = vperm.xlu0 %328, %v275
    %v330 = vpop.permute.xlu0 %329
    %333 = vset.pattern.permute.xlu0 0
    %334 = vperm.xlu0 %333, %v276
    %v335 = vpop.permute.xlu0 %334
    %338 = vset.pattern.permute.xlu0 0
    %339 = vperm.xlu0 %338, %v277
    %v340 = vpop.permute.xlu0 %339
    %343 = vset.pattern.permute.xlu0 0
    %344 = vperm.xlu0 %343, %v278
    %v345 = vpop.permute.xlu0 %344
    %348 = vset.pattern.permute.xlu0 0
    %349 = vperm.xlu0 %348, %v279
    %v350 = vpop.permute.xlu0 %349
    %353 = vset.pattern.permute.xlu0 0
    %354 = vperm.xlu0 %353, %v280
    %v355 = vpop.permute.xlu0 %354
    %358 = vset.pattern.permute.xlu0 0
    %359 = vperm.xlu0 %358, %v281
    %v360 = vpop.permute.xlu0 %359
    %v362 = vmul.f32 %v250, %v285
    %v363 = vmul.f32 %v251, %v290
    %v364 = vmul.f32 %v252, %v295
    %v365 = vmul.f32 %v253, %v300
    %v366 = vmul.f32 %v254, %v305
    %v367 = vmul.f32 %v255, %v310
    %v368 = vmul.f32 %v256, %v315
    %v369 = vmul.f32 %v257, %v320
    %v370 = vmul.f32 %v258, %v325
    %v371 = vmul.f32 %v259, %v330
    %v372 = vmul.f32 %v260, %v335
    %v373 = vmul.f32 %v261, %v340
    %v374 = vmul.f32 %v262, %v345
    %v375 = vmul.f32 %v263, %v350
    %v376 = vmul.f32 %v264, %v355
    %v377 = vmul.f32 %v265, %v360
    %v378 = vlaneseq
    %v379 = vshrl.u32 %v378, 7
    %v380 = vadd.s32 %v379, 8
    %v381 = vlaneseq
    %v382 = vand.u32 %v381, 127
    %v383 = vmul.u32 %v379, 8
    %v384 = vmul.u32 %v380, 8
    %vm385 = vcmp.ge.s32.totalorder %v382, %v383
    %vm386 = vcmp.ge.s32.totalorder %v382, %v384
    %v387 = vadd.s32 %v383, 8
    %v388 = vadd.s32 %v384, 8
    %vm389 = vcmp.lt.s32.totalorder %v382, %v387
    %vm390 = vcmp.lt.s32.totalorder %v382, %v388
    %vm391 = vmand %vm385, %vm389
    %vm392 = vmand %vm386, %vm390
    %v393 = vsel %vm391, 1, 0
    %v394 = vsel %vm392, 1, 0
    %v395 = vcvt.s32.f32 %v393
    %v396 = vcvt.s32.f32 %v394
    %397 = vmatprep.subr.mxu0 0.0
    %398 = vmatpush1.msra.mxu0 %v377
    %399 = vmatprep.subr.mxu0 0.0
    %400 = vmatpush1.msra.mxu0 %v376
    %401 = vmatprep.subr.mxu0 0.0
    %402 = vmatpush1.msra.mxu0 %v375
    %403 = vmatprep.subr.mxu0 0.0
    %404 = vmatpush1.msra.mxu0 %v374
    %405 = vmatprep.subr.mxu0 0.0
    %406 = vmatpush1.msra.mxu0 %v373
    %407 = vmatprep.subr.mxu0 0.0
    %408 = vmatpush1.msra.mxu0 %v372
    %409 = vmatprep.subr.mxu0 0.0
    %410 = vmatpush1.msra.mxu0 %v371
    %411 = vmatprep.subr.mxu0 0.0
    %412 = vmatpush1.msra.mxu0 %v370
    %413 = vmatprep.subr.mxu0 0.0
    %414 = vmatpush1.msra.mxu0 %v369
    %415 = vmatprep.subr.mxu0 0.0
    %416 = vmatpush1.msra.mxu0 %v368
    %417 = vmatprep.subr.mxu0 0.0
    %418 = vmatpush1.msra.mxu0 %v367
    %419 = vmatprep.subr.mxu0 0.0
    %420 = vmatpush1.msra.mxu0 %v366
    %421 = vmatprep.subr.mxu0 0.0
    %422 = vmatpush1.msra.mxu0 %v365
    %423 = vmatprep.subr.mxu0 0.0
    %424 = vmatpush1.msra.mxu0 %v364
    %425 = vmatprep.subr.mxu0 0.0
    %426 = vmatpush1.msra.mxu0 %v363
    %427 = vmatprep.subr.mxu0 0.0
    %428 = vmatpush1.msra.mxu0 %v362
    %429 = vmatprep.subr.mxu0 0.0
    %430 = vmatpush2.msra.mxu0 0.0
    %431 = vmatprep.subr.mxu0 0.0
    %432 = vmatpush2.msra.mxu0 0.0
    %433 = vmatprep.subr.mxu0 0.0
    %434 = vmatpush2.msra.mxu0 0.0
    %435 = vmatprep.subr.mxu0 0.0
    %436 = vmatpush2.msra.mxu0 0.0
    %437 = vmatprep.subr.mxu0 0.0
    %438 = vmatpush2.msra.mxu0 0.0
    %439 = vmatprep.subr.mxu0 0.0
    %440 = vmatpush2.msra.mxu0 0.0
    %441 = vmatprep.subr.mxu0 0.0
    %442 = vmatpush2.msra.mxu0 0.0
    %443 = vmatprep.subr.mxu0 0.0
    %444 = vmatpush2.msra.mxu0 0.0
    %445 = vmatprep.subr.mxu0 0.0
    %446 = vmatpush2.msra.mxu0 0.0
    %447 = vmatprep.subr.mxu0 0.0
    %448 = vmatpush2.msra.mxu0 0.0
    %449 = vmatprep.subr.mxu0 0.0
    %450 = vmatpush2.msra.mxu0 0.0
    %451 = vmatprep.subr.mxu0 0.0
    %452 = vmatpush2.msra.mxu0 0.0
    %453 = vmatprep.subr.mxu0 0.0
    %454 = vmatpush2.msra.mxu0 0.0
    %455 = vmatprep.subr.mxu0 0.0
    %456 = vmatpush2.msra.mxu0 0.0
    %457 = vmatprep.subr.mxu0 0.0
    %458 = vmatpush2.msra.mxu0 0.0
    %459 = vmatprep.subr.mxu0 0.0
    %460 = vmatpush2.msra.mxu0 0.0
    %461 = vmatprep.mubr.f32.mxu0 0.0
    %462 = vmatmul.mubr.f32.gmra.mxu0 %v395
    %v463 = vpop.f32.mrf.mxu0
    %v464 = vadd.f32 0.0, %v463
    %v465 = vpop.f32.mrf.mxu0
    %466 = vmatprep.mubr.f32.mxu0 0.0
    %467 = vmatmul.mubr.f32.gmra.mxu0 %v396
    %v468 = vpop.f32.mrf.mxu0
    %v469 = vadd.f32 0.0, %v468
    %v470 = vpop.f32.mrf.mxu0
    %471 = vdwg.mxu0
    %v472 = vld [vmem:[#allocation2 + $0x28] sm:$0xff]
    %v473 = vld [vmem:[#allocation2 + $0x30] sm:$0xff]
    %v474 = vld [vmem:[#allocation2 + $0x38] sm:$0xff]
    %v475 = vld [vmem:[#allocation2 + $0x40] sm:$0xff]
    %v476 = vld [vmem:[#allocation2 + $0x48] sm:$0xff]
    %v477 = vld [vmem:[#allocation2 + $0x50] sm:$0xff]
    %v478 = vld [vmem:[#allocation2 + $0x58] sm:$0xff]
    %v479 = vld [vmem:[#allocation2 + $0x60] sm:$0xff]
    %v480 = vld [vmem:[#allocation2 + $0x68] sm:$0xff]
    %v481 = vld [vmem:[#allocation2 + $0x70] sm:$0xff]
    %v482 = vld [vmem:[#allocation2 + $0x78] sm:$0xff]
    %v483 = vld [vmem:[#allocation2 + $0x80] sm:$0xff]
    %v484 = vld [vmem:[#allocation2 + $0x88] sm:$0xff]
    %v485 = vld [vmem:[#allocation2 + $0x90] sm:$0xff]
    %v486 = vld [vmem:[#allocation2 + $0x98] sm:$0xff]
    %v487 = vld [vmem:[#allocation2 + $0xa0] sm:$0xff]
    %v488 = vld [vmem:[#allocation2 + $0xa8] sm:$0xff]
    %v489 = vld [vmem:[#allocation2 + $0xb0] sm:$0xff]
    %v490 = vld [vmem:[#allocation2 + $0xb8] sm:$0xff]
    %v491 = vld [vmem:[#allocation2 + $0xc0] sm:$0xff]
    %v492 = vld [vmem:[#allocation2 + $0xc8] sm:$0xff]
    %v493 = vld [vmem:[#allocation2 + $0xd0] sm:$0xff]
    %v494 = vld [vmem:[#allocation2 + $0xd8] sm:$0xff]
    %v495 = vld [vmem:[#allocation2 + $0xe0] sm:$0xff]
    %v496 = vld [vmem:[#allocation2 + $0xe8] sm:$0xff]
    %v497 = vld [vmem:[#allocation2 + $0xf0] sm:$0xff]
    %v498 = vld [vmem:[#allocation2 + $0xf8] sm:$0xff]
    %v499 = vld [vmem:[#allocation2 + $0x100] sm:$0xff]
    %v500 = vld [vmem:[#allocation2 + $0x108] sm:$0xff]
    %v501 = vld [vmem:[#allocation2 + $0x110] sm:$0xff]
    %v502 = vld [vmem:[#allocation2 + $0x118] sm:$0xff]
    %v503 = vld [vmem:[#allocation2 + $0x120] sm:$0xff]
    %504 = vmatprep.subr.mxu0 0.0
    %505 = vmatpush1.msra.mxu0 %v503
    %506 = vmatprep.subr.mxu0 0.0
    %507 = vmatpush1.msra.mxu0 %v502
    %508 = vmatprep.subr.mxu0 0.0
    %509 = vmatpush1.msra.mxu0 %v501
    %510 = vmatprep.subr.mxu0 0.0
    %511 = vmatpush1.msra.mxu0 %v500
    %512 = vmatprep.subr.mxu0 0.0
    %513 = vmatpush1.msra.mxu0 %v499
    %514 = vmatprep.subr.mxu0 0.0
    %515 = vmatpush1.msra.mxu0 %v498
    %516 = vmatprep.subr.mxu0 0.0
    %517 = vmatpush1.msra.mxu0 %v497
    %518 = vmatprep.subr.mxu0 0.0
    %519 = vmatpush1.msra.mxu0 %v496
    %520 = vmatprep.subr.mxu0 0.0
    %521 = vmatpush1.msra.mxu0 %v495
    %522 = vmatprep.subr.mxu0 0.0
    %523 = vmatpush1.msra.mxu0 %v494
    %524 = vmatprep.subr.mxu0 0.0
    %525 = vmatpush1.msra.mxu0 %v493
    %526 = vmatprep.subr.mxu0 0.0
    %527 = vmatpush1.msra.mxu0 %v492
    %528 = vmatprep.subr.mxu0 0.0
    %529 = vmatpush1.msra.mxu0 %v491
    %530 = vmatprep.subr.mxu0 0.0
    %531 = vmatpush1.msra.mxu0 %v490
    %532 = vmatprep.subr.mxu0 0.0
    %533 = vmatpush1.msra.mxu0 %v489
    %534 = vmatprep.subr.mxu0 0.0
    %535 = vmatpush1.msra.mxu0 %v488
    %536 = vmatprep.subr.mxu0 0.0
    %537 = vmatpush2.msra.mxu0 0.0
    %538 = vmatprep.subr.mxu0 0.0
    %539 = vmatpush2.msra.mxu0 0.0
    %540 = vmatprep.subr.mxu0 0.0
    %541 = vmatpush2.msra.mxu0 0.0
    %542 = vmatprep.subr.mxu0 0.0
    %543 = vmatpush2.msra.mxu0 0.0
    %544 = vmatprep.subr.mxu0 0.0
    %545 = vmatpush2.msra.mxu0 0.0
    %546 = vmatprep.subr.mxu0 0.0
    %547 = vmatpush2.msra.mxu0 0.0
    %548 = vmatprep.subr.mxu0 0.0
    %549 = vmatpush2.msra.mxu0 0.0
    %550 = vmatprep.subr.mxu0 0.0
    %551 = vmatpush2.msra.mxu0 0.0
    %552 = vmatprep.subr.mxu0 0.0
    %553 = vmatpush2.msra.mxu0 0.0
    %554 = vmatprep.subr.mxu0 0.0
    %555 = vmatpush2.msra.mxu0 0.0
    %556 = vmatprep.subr.mxu0 0.0
    %557 = vmatpush2.msra.mxu0 0.0
    %558 = vmatprep.subr.mxu0 0.0
    %559 = vmatpush2.msra.mxu0 0.0
    %560 = vmatprep.subr.mxu0 0.0
    %561 = vmatpush2.msra.mxu0 0.0
    %562 = vmatprep.subr.mxu0 0.0
    %563 = vmatpush2.msra.mxu0 0.0
    %564 = vmatprep.subr.mxu0 0.0
    %565 = vmatpush2.msra.mxu0 0.0
    %566 = vmatprep.subr.mxu0 0.0
    %567 = vmatpush2.msra.mxu0 0.0
    %568 = vmatprep.mubr.f32.mxu0 0.0
    %569 = vmatmul.mubr.f32.gmra.mxu0 %v469
    %v570 = vpop.f32.mrf.mxu0
    %v571 = vadd.f32 0.0, %v570
    %v572 = vpop.f32.mrf.mxu0
    %573 = vdwg.mxu0
    %574 = vmatprep.subr.mxu0 0.0
    %575 = vmatpush1.msra.mxu0 %v487
    %576 = vmatprep.subr.mxu0 0.0
    %577 = vmatpush1.msra.mxu0 %v486
    %578 = vmatprep.subr.mxu0 0.0
    %579 = vmatpush1.msra.mxu0 %v485
    %580 = vmatprep.subr.mxu0 0.0
    %581 = vmatpush1.msra.mxu0 %v484
    %582 = vmatprep.subr.mxu0 0.0
    %583 = vmatpush1.msra.mxu0 %v483
    %584 = vmatprep.subr.mxu0 0.0
    %585 = vmatpush1.msra.mxu0 %v482
    %586 = vmatprep.subr.mxu0 0.0
    %587 = vmatpush1.msra.mxu0 %v481
    %588 = vmatprep.subr.mxu0 0.0
    %589 = vmatpush1.msra.mxu0 %v480
    %590 = vmatprep.subr.mxu0 0.0
    %591 = vmatpush1.msra.mxu0 %v479
    %592 = vmatprep.subr.mxu0 0.0
    %593 = vmatpush1.msra.mxu0 %v478
    %594 = vmatprep.subr.mxu0 0.0
    %595 = vmatpush1.msra.mxu0 %v477
    %596 = vmatprep.subr.mxu0 0.0
    %597 = vmatpush1.msra.mxu0 %v476
    %598 = vmatprep.subr.mxu0 0.0
    %599 = vmatpush1.msra.mxu0 %v475
    %600 = vmatprep.subr.mxu0 0.0
    %601 = vmatpush1.msra.mxu0 %v474
    %602 = vmatprep.subr.mxu0 0.0
    %603 = vmatpush1.msra.mxu0 %v473
    %604 = vmatprep.subr.mxu0 0.0
    %605 = vmatpush1.msra.mxu0 %v472
    %606 = vmatprep.subr.mxu0 0.0
    %607 = vmatpush2.msra.mxu0 0.0
    %608 = vmatprep.subr.mxu0 0.0
    %609 = vmatpush2.msra.mxu0 0.0
    %610 = vmatprep.subr.mxu0 0.0
    %611 = vmatpush2.msra.mxu0 0.0
    %612 = vmatprep.subr.mxu0 0.0
    %613 = vmatpush2.msra.mxu0 0.0
    %614 = vmatprep.subr.mxu0 0.0
    %615 = vmatpush2.msra.mxu0 0.0
    %616 = vmatprep.subr.mxu0 0.0
    %617 = vmatpush2.msra.mxu0 0.0
    %618 = vmatprep.subr.mxu0 0.0
    %619 = vmatpush2.msra.mxu0 0.0
    %620 = vmatprep.subr.mxu0 0.0
    %621 = vmatpush2.msra.mxu0 0.0
    %622 = vmatprep.subr.mxu0 0.0
    %623 = vmatpush2.msra.mxu0 0.0
    %624 = vmatprep.subr.mxu0 0.0
    %625 = vmatpush2.msra.mxu0 0.0
    %626 = vmatprep.subr.mxu0 0.0
    %627 = vmatpush2.msra.mxu0 0.0
    %628 = vmatprep.subr.mxu0 0.0
    %629 = vmatpush2.msra.mxu0 0.0
    %630 = vmatprep.subr.mxu0 0.0
    %631 = vmatpush2.msra.mxu0 0.0
    %632 = vmatprep.subr.mxu0 0.0
    %633 = vmatpush2.msra.mxu0 0.0
    %634 = vmatprep.subr.mxu0 0.0
    %635 = vmatpush2.msra.mxu0 0.0
    %636 = vmatprep.subr.mxu0 0.0
    %637 = vmatpush2.msra.mxu0 0.0
    %638 = vmatprep.mubr.f32.mxu0 0.0
    %639 = vmatmul.mubr.f32.gmra.mxu0 %v464
    %v640 = vpop.f32.mrf.mxu0
    %v641 = vadd.f32 %v571, %v640
    %v642 = vpop.f32.mrf.mxu0
    %643 = vdwg.mxu0
    %v644 = vlaneseq
    %v645 = vshrl.u32 %v644, 7
    %v646 = vsub.s32 0, %v645
    %v647 = vrot.slane %v29, %v646
    %v648 = vadd.f32 %v641, %v647
    %v649 = vmax.f32 %v648, 0.0
    %v650 = vld [vmem:[#allocation2 + $0x128] sm:$0xff]
    %v651 = vld [vmem:[#allocation2 + $0x130] sm:$0xff]
    %v652 = vld [vmem:[#allocation2 + $0x138] sm:$0xff]
    %v653 = vld [vmem:[#allocation2 + $0x140] sm:$0xff]
    %v654 = vld [vmem:[#allocation2 + $0x148] sm:$0xff]
    %v655 = vld [vmem:[#allocation2 + $0x150] sm:$0xff]
    %v656 = vld [vmem:[#allocation2 + $0x158] sm:$0xff]
    %v657 = vld [vmem:[#allocation2 + $0x160] sm:$0xff]
    %v658 = vld [vmem:[#allocation2 + $0x168] sm:$0xff]
    %v659 = vld [vmem:[#allocation2 + $0x170] sm:$0xff]
    %v660 = vld [vmem:[#allocation2 + $0x178] sm:$0xff]
    %v661 = vld [vmem:[#allocation2 + $0x180] sm:$0xff]
    %v662 = vld [vmem:[#allocation2 + $0x188] sm:$0xff]
    %v663 = vld [vmem:[#allocation2 + $0x190] sm:$0xff]
    %v664 = vld [vmem:[#allocation2 + $0x198] sm:$0xff]
    %v665 = vld [vmem:[#allocation2 + $0x1a0] sm:$0xff]
    %v666 = vlaneseq
    %v667 = vshrl.u32 %v666, 7
    %v668 = vsub.s32 0, %v667
    %v669 = vrot.slane %v30, %v668
    %670 = vmatprep.subr.mxu0 0.0
    %671 = vmatpush1.msra.mxu0 %v665
    %672 = vmatprep.subr.mxu0 0.0
    %673 = vmatpush1.msra.mxu0 %v664
    %674 = vmatprep.subr.mxu0 0.0
    %675 = vmatpush1.msra.mxu0 %v663
    %676 = vmatprep.subr.mxu0 0.0
    %677 = vmatpush1.msra.mxu0 %v662
    %678 = vmatprep.subr.mxu0 0.0
    %679 = vmatpush1.msra.mxu0 %v661
    %680 = vmatprep.subr.mxu0 0.0
    %681 = vmatpush1.msra.mxu0 %v660
    %682 = vmatprep.subr.mxu0 0.0
    %683 = vmatpush1.msra.mxu0 %v659
    %684 = vmatprep.subr.mxu0 0.0
    %685 = vmatpush1.msra.mxu0 %v658
    %686 = vmatprep.subr.mxu0 0.0
    %687 = vmatpush1.msra.mxu0 %v657
    %688 = vmatprep.subr.mxu0 0.0
    %689 = vmatpush1.msra.mxu0 %v656
    %690 = vmatprep.subr.mxu0 0.0
    %691 = vmatpush1.msra.mxu0 %v655
    %692 = vmatprep.subr.mxu0 0.0
    %693 = vmatpush1.msra.mxu0 %v654
    %694 = vmatprep.subr.mxu0 0.0
    %695 = vmatpush1.msra.mxu0 %v653
    %696 = vmatprep.subr.mxu0 0.0
    %697 = vmatpush1.msra.mxu0 %v652
    %698 = vmatprep.subr.mxu0 0.0
    %699 = vmatpush1.msra.mxu0 %v651
    %700 = vmatprep.subr.mxu0 0.0
    %701 = vmatpush1.msra.mxu0 %v650
    %702 = vmatprep.subr.mxu0 0.0
    %703 = vmatpush2.msra.mxu0 0.0
    %704 = vmatprep.subr.mxu0 0.0
    %705 = vmatpush2.msra.mxu0 0.0
    %706 = vmatprep.subr.mxu0 0.0
    %707 = vmatpush2.msra.mxu0 0.0
    %708 = vmatprep.subr.mxu0 0.0
    %709 = vmatpush2.msra.mxu0 0.0
    %710 = vmatprep.subr.mxu0 0.0
    %711 = vmatpush2.msra.mxu0 0.0
    %712 = vmatprep.subr.mxu0 0.0
    %713 = vmatpush2.msra.mxu0 0.0
    %714 = vmatprep.subr.mxu0 0.0
    %715 = vmatpush2.msra.mxu0 0.0
    %716 = vmatprep.subr.mxu0 0.0
    %717 = vmatpush2.msra.mxu0 0.0
    %718 = vmatprep.subr.mxu0 0.0
    %719 = vmatpush2.msra.mxu0 0.0
    %720 = vmatprep.subr.mxu0 0.0
    %721 = vmatpush2.msra.mxu0 0.0
    %722 = vmatprep.subr.mxu0 0.0
    %723 = vmatpush2.msra.mxu0 0.0
    %724 = vmatprep.subr.mxu0 0.0
    %725 = vmatpush2.msra.mxu0 0.0
    %726 = vmatprep.subr.mxu0 0.0
    %727 = vmatpush2.msra.mxu0 0.0
    %728 = vmatprep.subr.mxu0 0.0
    %729 = vmatpush2.msra.mxu0 0.0
    %730 = vmatprep.subr.mxu0 0.0
    %731 = vmatpush2.msra.mxu0 0.0
    %732 = vmatprep.subr.mxu0 0.0
    %733 = vmatpush2.msra.mxu0 0.0
    %734 = vmatprep.mubr.f32.mxu0 0.0
    %735 = vmatmul.mubr.f32.gmra.mxu0 %v649
    %v736 = vpop.f32.mrf.mxu0
    %v737 = vadd.f32 %v669, %v736
    %v738 = vpop.f32.mrf.mxu0
    %739 = vdwg.mxu0
    %v740 = vmax.f32 %v737, 0.0
    %v741 = vld [vmem:[#allocation2 + $0x1a8] sm:$0xff]
    %v742 = vld [vmem:[#allocation2 + $0x1b0] sm:$0xff]
    %v743 = vld [vmem:[#allocation2 + $0x1b8] sm:$0xff]
    %v744 = vld [vmem:[#allocation2 + $0x1c0] sm:$0xff]
    %v745 = vld [vmem:[#allocation2 + $0x1c8] sm:$0xff]
    %v746 = vld [vmem:[#allocation2 + $0x1d0] sm:$0xff]
    %v747 = vld [vmem:[#allocation2 + $0x1d8] sm:$0xff]
    %v748 = vld [vmem:[#allocation2 + $0x1e0] sm:$0xff]
    %v749 = vld [vmem:[#allocation2 + $0x1e8] sm:$0xff]
    %v750 = vld [vmem:[#allocation2 + $0x1f0] sm:$0xff]
    %v751 = vld [vmem:[#allocation2 + $0x1f8] sm:$0xff]
    %v752 = vld [vmem:[#allocation2 + $0x200] sm:$0xff]
    %v753 = vld [vmem:[#allocation2 + $0x208] sm:$0xff]
    %v754 = vld [vmem:[#allocation2 + $0x210] sm:$0xff]
    %v755 = vld [vmem:[#allocation2 + $0x218] sm:$0xff]
    %v756 = vld [vmem:[#allocation2 + $0x220] sm:$0xff]
    %v757 = vlaneseq
    %v758 = vshrl.u32 %v757, 7
    %v759 = vsub.s32 0, %v758
    %v760 = vrot.slane %v31, %v759
    %761 = vmatprep.subr.mxu0 0.0
    %762 = vmatpush1.msra.mxu0 %v756
    %763 = vmatprep.subr.mxu0 0.0
    %764 = vmatpush1.msra.mxu0 %v755
    %765 = vmatprep.subr.mxu0 0.0
    %766 = vmatpush1.msra.mxu0 %v754
    %767 = vmatprep.subr.mxu0 0.0
    %768 = vmatpush1.msra.mxu0 %v753
    %769 = vmatprep.subr.mxu0 0.0
    %770 = vmatpush1.msra.mxu0 %v752
    %771 = vmatprep.subr.mxu0 0.0
    %772 = vmatpush1.msra.mxu0 %v751
    %773 = vmatprep.subr.mxu0 0.0
    %774 = vmatpush1.msra.mxu0 %v750
    %775 = vmatprep.subr.mxu0 0.0
    %776 = vmatpush1.msra.mxu0 %v749
    %777 = vmatprep.subr.mxu0 0.0
    %778 = vmatpush1.msra.mxu0 %v748
    %779 = vmatprep.subr.mxu0 0.0
    %780 = vmatpush1.msra.mxu0 %v747
    %781 = vmatprep.subr.mxu0 0.0
    %782 = vmatpush1.msra.mxu0 %v746
    %783 = vmatprep.subr.mxu0 0.0
    %784 = vmatpush1.msra.mxu0 %v745
    %785 = vmatprep.subr.mxu0 0.0
    %786 = vmatpush1.msra.mxu0 %v744
    %787 = vmatprep.subr.mxu0 0.0
    %788 = vmatpush1.msra.mxu0 %v743
    %789 = vmatprep.subr.mxu0 0.0
    %790 = vmatpush1.msra.mxu0 %v742
    %791 = vmatprep.subr.mxu0 0.0
    %792 = vmatpush1.msra.mxu0 %v741
    %793 = vmatprep.subr.mxu0 0.0
    %794 = vmatpush2.msra.mxu0 0.0
    %795 = vmatprep.subr.mxu0 0.0
    %796 = vmatpush2.msra.mxu0 0.0
    %797 = vmatprep.subr.mxu0 0.0
    %798 = vmatpush2.msra.mxu0 0.0
    %799 = vmatprep.subr.mxu0 0.0
    %800 = vmatpush2.msra.mxu0 0.0
    %801 = vmatprep.subr.mxu0 0.0
    %802 = vmatpush2.msra.mxu0 0.0
    %803 = vmatprep.subr.mxu0 0.0
    %804 = vmatpush2.msra.mxu0 0.0
    %805 = vmatprep.subr.mxu0 0.0
    %806 = vmatpush2.msra.mxu0 0.0
    %807 = vmatprep.subr.mxu0 0.0
    %808 = vmatpush2.msra.mxu0 0.0
    %809 = vmatprep.subr.mxu0 0.0
    %810 = vmatpush2.msra.mxu0 0.0
    %811 = vmatprep.subr.mxu0 0.0
    %812 = vmatpush2.msra.mxu0 0.0
    %813 = vmatprep.subr.mxu0 0.0
    %814 = vmatpush2.msra.mxu0 0.0
    %815 = vmatprep.subr.mxu0 0.0
    %816 = vmatpush2.msra.mxu0 0.0
    %817 = vmatprep.subr.mxu0 0.0
    %818 = vmatpush2.msra.mxu0 0.0
    %819 = vmatprep.subr.mxu0 0.0
    %820 = vmatpush2.msra.mxu0 0.0
    %821 = vmatprep.subr.mxu0 0.0
    %822 = vmatpush2.msra.mxu0 0.0
    %823 = vmatprep.subr.mxu0 0.0
    %824 = vmatpush2.msra.mxu0 0.0
    %825 = vmatprep.mubr.f32.mxu0 0.0
    %826 = vmatmul.mubr.f32.gmra.mxu0 %v740
    %v827 = vpop.f32.mrf.mxu0
    %v828 = vadd.f32 %v760, %v827
    %v829 = vpop.f32.mrf.mxu0
    %830 = vdwg.mxu0
    %831 = vst [vmem:[%s3] sm:$0xff] %v828
    // Predicated region
    $region18: #{bow_forward.1} parent=1 // pred_check
      _
    $region19: #{bow_forward.1} parent=1 // pred_check_branch
      %833 = sbr.rel (0) target = $region21
    $region20: #{bow_forward.1} parent=1 // pred_region
      _
    $region21: #{bow_forward.1} parent=1 // pred_fallthru
      _
    // Predicated region
    $region22: #{bow_forward.1} parent=1 // pred_check
      _
    $region23: #{bow_forward.1} parent=1 // pred_check_branch
      %835 = sbr.rel (0) target = $region25
    $region24: #{bow_forward.1} parent=1 // pred_region
      _
    $region25: #{bow_forward.1} parent=1 // pred_fallthru
      _
    %836 = vsyncpa [#allocation3], 1

</llo_original>
